<compile_context>
chip_gen: v6e
topology: v6e:2x2x1
jax: 0.10.0
libtpu: 0.0.40
codegen_flags: <defaults>
</compile_context>

<pallas_src>
import functools

import jax
import jax.numpy as jnp
from jax.experimental import pallas as pl
from jax.experimental.pallas import tpu as pltpu


def bay_loss_kernel(prob_ref, target_ref, density_ref, out_ref, acc_ref,
                    *, m_true, needs_mask):
    """Grid: (B, cdiv(M, TM)). b axis is 'parallel'; m axis is the reduction."""
    m = pl.program_id(1)
    last_m = pl.num_programs(1) - 1
    tm = prob_ref.shape[-1]  # static block width (multiple of 128)

    @pl.when(m == 0)
    def _init():
        acc_ref[...] = jnp.zeros_like(acc_ref)

    # Lane-partial accumulation: fold the TM lanes of this tile into 128-lane
    # partials with pure VPU multiply/adds (no per-step XLU reduce). Slices are
    # 128-aligned so they map directly onto vreg columns (no relayout).
    lane_iota = None
    if needs_mask:
        lane_iota = jax.lax.broadcasted_iota(jnp.int32, (1, 128), 1)

    part = acc_ref[...]                                            # (N, 128)
    for g in range(tm // 128):
        lo = g * 128
        p = prob_ref[0, :, lo:lo + 128].astype(jnp.float32)        # (N, 128)
        d = density_ref[0, :, lo:lo + 128].astype(jnp.float32)     # (1, 128)
        contrib = p * d                                            # (N, 128)
        if needs_mask:
            # Zero out lanes past the true pixel count (tail tile contains
            # unspecified data for out-of-bounds elements).
            remaining = m_true - (m * tm + lo)
            contrib = jnp.where(lane_iota < remaining, contrib, 0.0)
        part = part + contrib
    acc_ref[...] = part

    @pl.when(m == last_m)
    def _finalize():
        # One cross-lane reduce per sample, then the L1 term.
        pre_count = jnp.sum(acc_ref[...], axis=-1, keepdims=True)  # (N, 1)
        tgt = target_ref[0].astype(jnp.float32)                    # (N, 1)
        loss_b = jnp.sum(jnp.abs(tgt - pre_count))                 # scalar
        # Lane-dense, unmasked store of the per-sample partial loss.
        out_ref[...] = jnp.full(out_ref.shape, loss_b, dtype=jnp.float32)


def _pick_tm(m_pixels, n_rows, itemsize, lane_target=2048,
             buf_budget_bytes=12 * 1024 * 1024):
    """Largest TM (multiple of 128) <= min(lane_target, round_up(M, 128)) that
    keeps the double-buffered prob tile within buf_budget_bytes."""
    m_rounded = ((m_pixels + 127) // 128) * 128
    cap = min(m_rounded, lane_target)
    best = 128
    t = 128
    while t <= cap:
        if 2 * n_rows * t * itemsize <= buf_budget_bytes:
            best = t
        t += 128
    return best


def bay_loss(prob, target, pre_density, use_background=True):
    """prob: (B, N, M); target: (B, N-1) if use_background else (B, N);
    pre_density: (B, 1, H, W) NCHW.  Returns scalar f32 loss."""
    B, N, M = prob.shape
    dens = pre_density.reshape(B, 1, -1)
    assert dens.shape[-1] == M, "prob pixel axis must match H*W of pre_density"

    if use_background:
        # target[:-1] = target_list[idx]; background bin target stays zero.
        tgt = jnp.concatenate(
            [target.astype(jnp.float32), jnp.zeros((B, 1), jnp.float32)], axis=1)
    else:
        tgt = target.astype(jnp.float32)
    tgt = tgt.reshape(B, N, 1)

    itemsize = jnp.dtype(prob.dtype).itemsize
    tm = _pick_tm(M, N, itemsize)
    num_m = pl.cdiv(M, tm)
    needs_mask = (M % tm) != 0 or (M % 128) != 0

    # VMEM budget: 2-deep prob + density tiles, tiny target/output blocks,
    # and the (N, 128) f32 lane-partial scratch. Leave headroom, cap under
    # v7x's 64 MiB physical VMEM.
    n_pad = ((N + 7) // 8) * 8
    need = (2 * (N * tm + tm) * itemsize      # prob + density (double-buffered)
            + 2 * n_pad * 128 * 4             # target blocks (sublane-padded)
            + 2 * 8 * 128 * 4                 # output blocks
            + n_pad * 128 * 4)                # lane-partial scratch
    vmem_limit = int(min(max(2 * need, 32 * 1024 * 1024), 48 * 1024 * 1024))

    cost = pl.CostEstimate(
        flops=2 * B * N * M,
        transcendentals=0,
        bytes_accessed=(prob.size * itemsize
                        + dens.size * jnp.dtype(dens.dtype).itemsize
                        + tgt.size * 4 + B * 8 * 128 * 4))

    kernel = functools.partial(bay_loss_kernel, m_true=M, needs_mask=needs_mask)

    out = pl.pallas_call(
        kernel,
        out_shape=jax.ShapeDtypeStruct((B, 8, 128), jnp.float32),
        grid_spec=pltpu.PrefetchScalarGridSpec(
            num_scalar_prefetch=0,
            grid=(B, num_m),
            in_specs=[
                pl.BlockSpec((1, N, tm), lambda b, m: (b, 0, m)),   # prob
                pl.BlockSpec((1, N, 1), lambda b, m: (b, 0, 0)),    # target
                pl.BlockSpec((1, 1, tm), lambda b, m: (b, 0, m)),   # density
            ],
            out_specs=pl.BlockSpec((1, 8, 128), lambda b, m: (b, 0, 0)),
            scratch_shapes=[pltpu.VMEM((N, 128), jnp.float32)],
        ),
        compiler_params=pltpu.CompilerParams(
            dimension_semantics=("parallel", "arbitrary"),
            vmem_limit_bytes=vmem_limit),
        cost_estimate=cost,
    )(prob, tgt, dens)

    # loss = (sum over samples of the per-sample L1 term) / len(prob_list)
    return jnp.mean(out[:, 0, 0])


def bay_loss_ref(prob, target, pre_density, use_background=True):
    """Pure-JAX reference mirroring the PyTorch forward."""
    B, N, M = prob.shape
    dens = pre_density.reshape(B, -1).astype(jnp.float32)
    if use_background:
        tgt = jnp.concatenate(
            [target.astype(jnp.float32), jnp.zeros((B, 1), jnp.float32)], axis=1)
    else:
        tgt = target.astype(jnp.float32)
    pre_count = jnp.einsum("bnm,bm->bn", prob.astype(jnp.float32), dens)
    return jnp.mean(jnp.sum(jnp.abs(tgt - pre_count), axis=1))


def _make_inputs(key, B, N, H, W):
    k1, k2, k3 = jax.random.split(key, 3)
    M = H * W
    # prob: per-pixel soft assignment to each annotation (softmax over N bins)
    logits = jax.random.normal(k1, (B, N, M), dtype=jnp.float32)
    prob = jax.nn.softmax(logits, axis=1)
    target = jax.random.uniform(k2, (B, N - 1), dtype=jnp.float32) * 3.0
    pre_density = jax.random.uniform(k3, (B, 1, H, W), dtype=jnp.float32)
    return prob, target, pre_density


if __name__ == "__main__":
    key = jax.random.PRNGKey(0)
    k_a, k_b = jax.random.split(key)

    # Case 1: lane-aligned pixel axis (H*W multiple of 128).
    prob, target, dens = _make_inputs(k_a, B=2, N=8, H=16, W=16)
    loss = jax.block_until_ready(bay_loss(prob, target, dens))
    ref = bay_loss_ref(prob, target, dens)
    assert jnp.allclose(loss, ref, rtol=1e-5, atol=1e-5), (loss, ref)

    # Case 2: ragged pixel axis (H*W = 255) — exercises the in-kernel tail mask.
    prob2, target2, dens2 = _make_inputs(k_b, B=2, N=8, H=15, W=17)
    loss2 = jax.block_until_ready(bay_loss(prob2, target2, dens2))
    ref2 = bay_loss_ref(prob2, target2, dens2)
    assert jnp.allclose(loss2, ref2, rtol=1e-5, atol=1e-5), (loss2, ref2)

    print("KERNEL_OK")
</pallas_src>

<mosaic_0001>
module attributes {stable_mosaic.version = 11 : i64} {
  func.func @bay_loss_kernel(%arg0: i32, %arg1: i32, %arg2: memref<1x8x256xf32, #tpu.memory_space<vmem>>, %arg3: memref<1x8x1xf32, #tpu.memory_space<vmem>>, %arg4: memref<1x1x256xf32, #tpu.memory_space<vmem>>, %arg5: memref<1x8x128xf32, #tpu.memory_space<vmem>>, %arg6: memref<8x128xf32, #tpu.memory_space<vmem>>) attributes {dimension_semantics = [#tpu.dimension_semantics<parallel>, #tpu.dimension_semantics<arbitrary>], iteration_bounds = array<i64: 2, 1>, scalar_prefetch = 0 : i64, scratch_operands = 1 : i64, tpu.core_type = #tpu.core_type<tc>, window_params = [{transform_indices = @transform_0, window_bounds = array<i64: 1, 8, 256>}, {transform_indices = @transform_1, window_bounds = array<i64: 1, 8, 1>}, {transform_indices = @transform_2, window_bounds = array<i64: 1, 1, 256>}, {transform_indices = @transform_3, window_bounds = array<i64: 1, 8, 128>}]} {
    %c0_i32 = arith.constant 0 : i32
    %0 = arith.cmpi eq, %arg1, %c0_i32 : i32
    %1 = arith.extui %0 : i1 to i32
    %c0_i32_0 = arith.constant 0 : i32
    %2 = arith.cmpi ne, %1, %c0_i32_0 : i32
    scf.if %2 {
      %cst = arith.constant 0.000000e+00 : f32
      %22 = vector.broadcast %cst : f32 to vector<8x128xf32>
      %c0_17 = arith.constant 0 : index
      %c0_18 = arith.constant 0 : index
      %23 = vector.load %arg6[%c0_17, %c0_18] : memref<8x128xf32, #tpu.memory_space<vmem>>, vector<8x128xf32>
      tpu.vector_store %arg6[%c0_17, %c0_18], %22 {strides = array<i32>} : memref<8x128xf32, #tpu.memory_space<vmem>>, vector<8x128xf32>,
    } else {
    }
    %c0 = arith.constant 0 : index
    %c0_1 = arith.constant 0 : index
    %3 = vector.load %arg6[%c0, %c0_1] : memref<8x128xf32, #tpu.memory_space<vmem>>, vector<8x128xf32>
    %c0_2 = arith.constant 0 : index
    %c0_3 = arith.constant 0 : index
    %c0_4 = arith.constant 0 : index
    %4 = vector.load %arg2[%c0_2, %c0_3, %c0_4] : memref<1x8x256xf32, #tpu.memory_space<vmem>>, vector<1x8x128xf32>
    %5 = vector.shape_cast %4 : vector<1x8x128xf32> to vector<8x128xf32>
    %c0_5 = arith.constant 0 : index
    %c0_6 = arith.constant 0 : index
    %c0_7 = arith.constant 0 : index
    %6 = vector.load %arg4[%c0_5, %c0_6, %c0_7] : memref<1x1x256xf32, #tpu.memory_space<vmem>>, vector<1x1x128xf32>
    %7 = vector.shape_cast %6 : vector<1x1x128xf32> to vector<1x128xf32>
    %8 = vector.broadcast %7 : vector<1x128xf32> to vector<8x128xf32>
    %9 = arith.mulf %5, %8 : vector<8x128xf32>
    %10 = arith.addf %3, %9 : vector<8x128xf32>
    %c0_8 = arith.constant 0 : index
    %c0_9 = arith.constant 0 : index
    %c128 = arith.constant 128 : index
    %11 = vector.load %arg2[%c0_8, %c0_9, %c128] : memref<1x8x256xf32, #tpu.memory_space<vmem>>, vector<1x8x128xf32>
    %12 = vector.shape_cast %11 : vector<1x8x128xf32> to vector<8x128xf32>
    %c0_10 = arith.constant 0 : index
    %c0_11 = arith.constant 0 : index
    %c128_12 = arith.constant 128 : index
    %13 = vector.load %arg4[%c0_10, %c0_11, %c128_12] : memref<1x1x256xf32, #tpu.memory_space<vmem>>, vector<1x1x128xf32>
    %14 = vector.shape_cast %13 : vector<1x1x128xf32> to vector<1x128xf32>
    %15 = vector.broadcast %14 : vector<1x128xf32> to vector<8x128xf32>
    %16 = arith.mulf %12, %15 : vector<8x128xf32>
    %17 = arith.addf %10, %16 : vector<8x128xf32>
    %c0_13 = arith.constant 0 : index
    %c0_14 = arith.constant 0 : index
    %18 = vector.load %arg6[%c0_13, %c0_14] : memref<8x128xf32, #tpu.memory_space<vmem>>, vector<8x128xf32>
    tpu.vector_store %arg6[%c0_13, %c0_14], %17 {strides = array<i32>} : memref<8x128xf32, #tpu.memory_space<vmem>>, vector<8x128xf32>,
    %c0_i32_15 = arith.constant 0 : i32
    %19 = arith.cmpi eq, %arg1, %c0_i32_15 : i32
    %20 = arith.extui %19 : i1 to i32
    %c0_i32_16 = arith.constant 0 : i32
    %21 = arith.cmpi ne, %20, %c0_i32_16 : i32
    scf.if %21 {
      %c0_17 = arith.constant 0 : index
      %c0_18 = arith.constant 0 : index
      %22 = vector.load %arg6[%c0_17, %c0_18] : memref<8x128xf32, #tpu.memory_space<vmem>>, vector<8x128xf32>
      %cst = arith.constant dense<0.000000e+00> : vector<8xf32>
      %23 = vector.multi_reduction <add>, %22, %cst [1] : vector<8x128xf32> to vector<8xf32>
      %24 = vector.shape_cast %23 : vector<8xf32> to vector<8x1xf32>
      %c0_19 = arith.constant 0 : index
      %c0_20 = arith.constant 0 : index
      %c0_21 = arith.constant 0 : index
      %25 = vector.load %arg3[%c0_19, %c0_20, %c0_21] : memref<1x8x1xf32, #tpu.memory_space<vmem>>, vector<1x8x1xf32>
      %26 = vector.shape_cast %25 : vector<1x8x1xf32> to vector<8x1xf32>
      %27 = arith.subf %26, %24 : vector<8x1xf32>
      %28 = math.absf %27 : vector<8x1xf32>
      %29 = vector.shape_cast %28 : vector<8x1xf32> to vector<1x8x1xf32>
      %cst_22 = arith.constant dense<0.000000e+00> : vector<1xf32>
      %30 = vector.multi_reduction <add>, %29, %cst_22 [1, 2] : vector<1x8x1xf32> to vector<1xf32>
      %31 = vector.shape_cast %30 : vector<1xf32> to vector<1x1x1xf32>
      %32 = vector.extract %31[0, 0, 0] : f32 from vector<1x1x1xf32>
      %33 = vector.broadcast %32 : f32 to vector<1x8x128xf32>
      %c0_23 = arith.constant 0 : index
      %c0_24 = arith.constant 0 : index
      %c0_25 = arith.constant 0 : index
      %34 = vector.load %arg5[%c0_23, %c0_24, %c0_25] : memref<1x8x128xf32, #tpu.memory_space<vmem>>, vector<1x8x128xf32>
      tpu.vector_store %arg5[%c0_23, %c0_24, %c0_25], %33 {strides = array<i32>} : memref<1x8x128xf32, #tpu.memory_space<vmem>>, vector<1x8x128xf32>,
    } else {
    }
    return
  }
  func.func @transform_0(%arg0: i32, %arg1: i32) -> (i32, i32, i32) {
    %c0_i32 = arith.constant 0 : i32
    %c0_i32_0 = arith.constant 0 : i32
    return %arg0, %c0_i32, %arg1 : i32, i32, i32
  }
  func.func @transform_1(%arg0: i32, %arg1: i32) -> (i32, i32, i32) {
    %c0_i32 = arith.constant 0 : i32
    %c0_i32_0 = arith.constant 0 : i32
    %c0_i32_1 = arith.constant 0 : i32
    return %arg0, %c0_i32, %c0_i32_0 : i32, i32, i32
  }
  func.func @transform_2(%arg0: i32, %arg1: i32) -> (i32, i32, i32) {
    %c0_i32 = arith.constant 0 : i32
    %c0_i32_0 = arith.constant 0 : i32
    return %arg0, %c0_i32, %arg1 : i32, i32, i32
  }
  func.func @transform_3(%arg0: i32, %arg1: i32) -> (i32, i32, i32) {
    %c0_i32 = arith.constant 0 : i32
    %c0_i32_0 = arith.constant 0 : i32
    %c0_i32_1 = arith.constant 0 : i32
    return %arg0, %c0_i32, %c0_i32_0 : i32, i32, i32
  }
}

</mosaic_0001>

<llo_original>
// kernel: tpu_custom_call.1
$region0: #{tpu_custom_call.1}
  #allocation0 [shape = 'u32[]', space=smem, size = 0x4, offset = 0x4, fixed_abs, tag = 'smem constant byte address 0x4 - core index']
  #allocation1 [shape = 'u32[144,128]{1,0:T(1,128)}', space=vmem, size = 0x12000, scoped, tag = 'internal scratch']
  #allocation2 [shape = 'f32[8,128]{1,0:T(8,128)}', space=vmem, size = 0x1000, scoped, tag = 'scratch operand']
  %s0 = inlined_call_operand.hbm [shape: f32[2,8,256], index: 0, kind: input, shape index: {}]
  %s1 = inlined_call_operand.vmem [shape: f32[2,8,1], index: 1, kind: input, shape index: {}]
  %s2 = inlined_call_operand.vmem [shape: f32[2,1,256], index: 2, kind: input, shape index: {}]
  %s3 = inlined_call_operand.hbm [shape: f32[2,8,128], index: 3, kind: output, shape index: {}]
  %s4 = sld [smem:[#allocation0]]
  $region57: #{tpu_custom_call.1} parent=0
    _
  %s6 = ssub.s32 1, %s4
  %s7 = scalar_select 0, %s6, %s4
  $region1: #{tpu_custom_call.1} parent=0
    #allocation3 [shape = 'u8[16384]{0}', space=vmem, size = 0x4000, scoped, tag = 'input window, operand 0']
    #allocation4 [shape = 's32[2]{0}', space=sflag, size = 0x8, scoped, tag = 'scoped memory for tpu_custom_call.1']
    #allocation5 [shape = 's32[2]{0}', space=sflag, size = 0x8, scoped, tag = 'scoped memory for tpu_custom_call.1']
    #allocation6 [shape = 'u8[8192]{0}', space=vmem, size = 0x2000, scoped, tag = 'output window, operand 0']
    %8 = vsyncpa [#allocation4], 0
    %s9 = scalar_lea.sflag [#allocation4], 1
    %10 = vsyncpa %s9, 0
    %11 = vsyncpa [#allocation5], 0
    %s12 = scalar_lea.sflag [#allocation5], 1
    %13 = vsyncpa %s12, 0
    loop: start=0, step=1, limit=4
    $region2: #{tpu_custom_call.1} parent=1 // loop_pre_header
      _
    $region3: #{tpu_custom_call.1} parent=1 // loop_header
      %s15 = sphi 0, %s19
      %p16 = scmp.ge.s32.totalorder %s15, 4
      %s22 = sphi 0, %s34
      %s23 = sphi 0, %s30
      %s24 = sphi 0, %s22
      %s25 = sphi 0, %s23
      %s26 = sphi 0, %s24
      %s27 = sphi 0, %s25
      %s39 = sphi 0, %s41
      %s42 = sphi 0, %s39
      %s43 = sphi 0, %s42
      %s59 = sphi 0, %s43
      %s65 = sphi 0, %s67
      %s68 = sphi 0, %s65
      %s69 = sphi 0, %s68
      %s85 = sphi 0, %s69
      %s93 = sphi 0, %s95
      %s96 = sphi 0, %s93
      %s97 = sphi 0, %s96
      %s113 = sphi 0, %s97
      %s119 = sphi 0, %s121
      %s122 = sphi 0, %s119
      %s123 = sphi 0, %s122
      %s139 = sphi 0, %s123
    $region4: #{tpu_custom_call.1} parent=1 // loop_header_branch
      %18 = sbr.rel (%p16) target = $region8
    $region5: #{tpu_custom_call.1} parent=1 // loop_body
      %s20 = ssub.s32 %s15, 1
      %s21 = ssub.s32 %s15, 2
      %s28 = sadd.s32 1, %s23
      %p29 = scmp.ge.s32.totalorder %s28, 1
      %s30 = scalar_select %p29, 0, %s28
      %s31 = sadd.s32 1, %s22
      %s32 = scalar_select %p29, %s31, %s22
      %p33 = scmp.ge.s32.totalorder %s32, 2
      %s34 = scalar_select %p33, 0, %s32
      %s35 = ssub.s32 %s22, %s34
      %s36 = ssub.s32 %s23, %s30
      %s37 = sor.u32 %s35, %s36
      %p38 = scmp.eq.s32.totalorder %s37, 0
      %s40 = sadd.s32 %s39, 1
      %s41 = scalar_select %p38, %s39, %s40
      %p44 = pneg %p38
      %p45 = scmp.eq.s32.totalorder %s15, 1
      %p46 = por %p44, %p45
      %p47 = scmp.ne.s32.totalorder %s39, %s42
      %p48 = scmp.eq.s32.totalorder %s15, 0
      %p49 = por %p47, %p48
      %p50 = scmp.ne.s32.totalorder %s39, %s42
      %p51 = scmp.eq.s32.totalorder %s20, 1
      %p52 = por %p50, %p51
      %p53 = scmp.ne.s32.totalorder %s42, %s43
      %p54 = scmp.eq.s32.totalorder %s20, 0
      %p55 = por %p53, %p54
      %p56 = scmp.ne.s32.totalorder %s42, %s43
      %p57 = scmp.eq.s32.totalorder %s21, 1
      %p58 = por %p56, %p57
      %p60 = scmp.ne.s32.totalorder %s43, %s59
      %p61 = scmp.eq.s32.totalorder %s21, 0
      %p62 = por %p60, %p61
      %s63 = ssub.s32 %s22, %s34
      %p64 = scmp.eq.s32.totalorder %s63, 0
      %s66 = sadd.s32 %s65, 1
      %s67 = scalar_select %p64, %s65, %s66
      %p70 = pneg %p64
      %p71 = scmp.eq.s32.totalorder %s15, 1
      %p72 = por %p70, %p71
      %p73 = scmp.ne.s32.totalorder %s65, %s68
      %p74 = scmp.eq.s32.totalorder %s15, 0
      %p75 = por %p73, %p74
      %p76 = scmp.ne.s32.totalorder %s65, %s68
      %p77 = scmp.eq.s32.totalorder %s20, 1
      %p78 = por %p76, %p77
      %p79 = scmp.ne.s32.totalorder %s68, %s69
      %p80 = scmp.eq.s32.totalorder %s20, 0
      %p81 = por %p79, %p80
      %p82 = scmp.ne.s32.totalorder %s68, %s69
      %p83 = scmp.eq.s32.totalorder %s21, 1
      %p84 = por %p82, %p83
      %p86 = scmp.ne.s32.totalorder %s69, %s85
      %p87 = scmp.eq.s32.totalorder %s21, 0
      %p88 = por %p86, %p87
      %s89 = ssub.s32 %s22, %s34
      %s90 = ssub.s32 %s23, %s30
      %s91 = sor.u32 %s89, %s90
      %p92 = scmp.eq.s32.totalorder %s91, 0
      %s94 = sadd.s32 %s93, 1
      %s95 = scalar_select %p92, %s93, %s94
      %p98 = pneg %p92
      %p99 = scmp.eq.s32.totalorder %s15, 1
      %p100 = por %p98, %p99
      %p101 = scmp.ne.s32.totalorder %s93, %s96
      %p102 = scmp.eq.s32.totalorder %s15, 0
      %p103 = por %p101, %p102
      %p104 = scmp.ne.s32.totalorder %s93, %s96
      %p105 = scmp.eq.s32.totalorder %s20, 1
      %p106 = por %p104, %p105
      %p107 = scmp.ne.s32.totalorder %s96, %s97
      %p108 = scmp.eq.s32.totalorder %s20, 0
      %p109 = por %p107, %p108
      %p110 = scmp.ne.s32.totalorder %s96, %s97
      %p111 = scmp.eq.s32.totalorder %s21, 1
      %p112 = por %p110, %p111
      %p114 = scmp.ne.s32.totalorder %s97, %s113
      %p115 = scmp.eq.s32.totalorder %s21, 0
      %p116 = por %p114, %p115
      %s117 = ssub.s32 %s22, %s34
      %p118 = scmp.eq.s32.totalorder %s117, 0
      %s120 = sadd.s32 %s119, 1
      %s121 = scalar_select %p118, %s119, %s120
      %p124 = pneg %p118
      %p125 = scmp.eq.s32.totalorder %s15, 1
      %p126 = por %p124, %p125
      %p127 = scmp.ne.s32.totalorder %s119, %s122
      %p128 = scmp.eq.s32.totalorder %s15, 0
      %p129 = por %p127, %p128
      %p130 = scmp.ne.s32.totalorder %s119, %s122
      %p131 = scmp.eq.s32.totalorder %s20, 1
      %p132 = por %p130, %p131
      %p133 = scmp.ne.s32.totalorder %s122, %s123
      %p134 = scmp.eq.s32.totalorder %s20, 0
      %p135 = por %p133, %p134
      %p136 = scmp.ne.s32.totalorder %s122, %s123
      %p137 = scmp.eq.s32.totalorder %s21, 1
      %p138 = por %p136, %p137
      %p140 = scmp.ne.s32.totalorder %s123, %s139
      %p141 = scmp.eq.s32.totalorder %s21, 0
      %p142 = por %p140, %p141
      %p143 = scmp.le.s32.totalorder 1, %s15
      %p144 = scmp.lt.s32.totalorder %s15, 3
      %p145 = pnand %p143, %p144
      %p146 = pneg %p145
      // Predicated region
      $region9: #{tpu_custom_call.1} parent=5 // pred_check
        _
      $region10: #{tpu_custom_call.1} parent=5 // pred_check_branch
        %148 = sbr.rel (%p145) target = $region12
      $region11: #{tpu_custom_call.1} parent=5 // pred_region
        %s149 = ssub.s32 %s15, 1
      $region12: #{tpu_custom_call.1} parent=5 // pred_fallthru
        _
      %p150 = scmp.lt.s32.totalorder %s15, 2
      // Predicated region
      $region13: #{tpu_custom_call.1} parent=5 // pred_check
        %p151 = pneg %p150
      $region14: #{tpu_custom_call.1} parent=5 // pred_check_branch
        %153 = sbr.rel (%p151) target = $region16
      $region15: #{tpu_custom_call.1} parent=5 // pred_region
        // Predicated region
        $region17: #{tpu_custom_call.1} parent=15 // pred_check
          %p154 = pneg %p49
        $region18: #{tpu_custom_call.1} parent=15 // pred_check_branch
          %156 = sbr.rel (%p154) target = $region20
        $region19: #{tpu_custom_call.1} parent=15 // pred_region
          %s157 = sand.u32 %s39, 1
          %s158 = scalar_lea.sflag [#allocation4], %s157
          %s159 = sand.u32 %s39, 1
          %s160 = smul.addr %s159, 16
          %s161 = scalar_lea.vmem [#allocation3], %s160
          %s162 = smul.u32 2, %s23
          %s164 = ssub.s32 256, 256
          %165 = vsyncadd %s158, %s164
          %s166 = smul.addr %s22, 2
          %s167 = sadd.s32 %s162, %s166
          %s168 = smul.addr %s167, 128
          %s169 = scalar_lea.hbm %s0, %s168
          %s171 = sshll.u32 %s161, 4
          %s172 = int_to_ptr.vmem [resolvable:$true] %s171
          %174 = dma.hbm_to_vmem [thread:$0]  %s169, 256, %s172, %s158
        $region20: #{tpu_custom_call.1} parent=15 // pred_fallthru
          _
        // Predicated region
        $region21: #{tpu_custom_call.1} parent=15 // pred_check
          %p175 = pneg %p75
        $region22: #{tpu_custom_call.1} parent=15 // pred_check_branch
          %177 = sbr.rel (%p175) target = $region24
        $region23: #{tpu_custom_call.1} parent=15 // pred_region
          %p178 = scmp.lt.s32.totalorder %s22, 1
          %s179 = scalar_select %p178, %s22, 1
          %s180 = smul.addr %s179, 8
          %s181 = scalar_lea.vmem %s1, %s180
        $region24: #{tpu_custom_call.1} parent=15 // pred_fallthru
          _
        // Predicated region
        $region25: #{tpu_custom_call.1} parent=15 // pred_check
          %p182 = pneg %p103
        $region26: #{tpu_custom_call.1} parent=15 // pred_check_branch
          %184 = sbr.rel (%p182) target = $region28
        $region27: #{tpu_custom_call.1} parent=15 // pred_region
          %s185 = smul.u32 2, %s23
          %p186 = scmp.lt.s32.totalorder %s22, 1
          %s187 = scalar_select %p186, %s22, 1
          %p188 = scmp.lt.s32.totalorder %s185, 1
          %s189 = scalar_select %p188, %s185, 1
          %s190 = smul.addr %s187, 2
          %s191 = sadd.s32 %s189, %s190
          %s192 = scalar_lea.vmem %s2, %s191
          %s193 = smul.u32 2, %s23
        $region28: #{tpu_custom_call.1} parent=15 // pred_fallthru
          _
      $region16: #{tpu_custom_call.1} parent=5 // pred_fallthru
        _
      %p194 = scmp.le.s32.totalorder 1, %s15
      %p195 = scmp.lt.s32.totalorder %s15, 3
      %p196 = pnand %p194, %p195
      %p197 = pneg %p196
      // Predicated region
      $region29: #{tpu_custom_call.1} parent=5 // pred_check
        _
      $region30: #{tpu_custom_call.1} parent=5 // pred_check_branch
        %199 = sbr.rel (%p196) target = $region32
      $region31: #{tpu_custom_call.1} parent=5 // pred_region
        %s200 = ssub.s32 %s15, 1
        %s201 = sand.u32 %s42, 1
        %s202 = scalar_lea.sflag [#allocation4], %s201
        %s203 = sand.u32 %s42, 1
        %s204 = smul.addr %s203, 16
        %s205 = scalar_lea.vmem [#allocation3], %s204
        // Predicated region
        $region33: #{tpu_custom_call.1} parent=31 // pred_check
          %p206 = pneg %p55
        $region34: #{tpu_custom_call.1} parent=31 // pred_check_branch
          %208 = sbr.rel (%p206) target = $region36
        $region35: #{tpu_custom_call.1} parent=31 // pred_region
          %209 = dma.done %s202, 256
        $region36: #{tpu_custom_call.1} parent=31 // pred_fallthru
          _
        %s210 = sand.u32 %s42, 1
        %s211 = scalar_lea.sflag [#allocation4], %s210
        %s212 = sand.u32 %s42, 1
        %s213 = smul.addr %s212, 16
        %s214 = scalar_lea.vmem [#allocation3], %s213
        %p215 = pneg %p55
        %p216 = pneg %p52
        %p217 = scmp.lt.s32.totalorder %s24, 1
        %s218 = scalar_select %p217, %s24, 1
        %s219 = smul.addr %s218, 8
        %s220 = scalar_lea.vmem %s1, %s219
        %p221 = pneg %p81
        %p222 = pneg %p78
        %s223 = smul.u32 2, %s25
        %p224 = scmp.lt.s32.totalorder %s24, 1
        %s225 = scalar_select %p224, %s24, 1
        %p226 = scmp.lt.s32.totalorder %s223, 1
        %s227 = scalar_select %p226, %s223, 1
        %s228 = smul.addr %s225, 2
        %s229 = sadd.s32 %s227, %s228
        %s230 = scalar_lea.vmem %s2, %s229
        %p231 = pneg %p109
        %p232 = pneg %p106
        %p233 = pneg %p135
        %p234 = pneg %p132
        %s235 = sand.u32 %s122, 1
        %s236 = scalar_lea.sflag [#allocation5], %s235
        %s237 = sand.u32 %s122, 1
        %s238 = smul.addr %s237, 8
        %s239 = scalar_lea.vmem [#allocation6], %s238
        %s240 = smul.u32 2, %s25
        %p241 = scmp.lt.s32.totalorder %s24, 1
        %s242 = scalar_select %p241, %s24, 1
        %s243 = smul.addr %s242, 8
        %s244 = scalar_lea.vmem %s1, %s243
        %s245 = smul.u32 2, %s25
        %p246 = scmp.lt.s32.totalorder %s24, 1
        %s247 = scalar_select %p246, %s24, 1
        %p248 = scmp.lt.s32.totalorder %s245, 1
        %s249 = scalar_select %p248, %s245, 1
        %s250 = smul.addr %s247, 2
        %s251 = sadd.s32 %s249, %s250
        %s252 = scalar_lea.vmem %s2, %s251
        %s253 = smul.u32 2, %s25
        %p254 = scmp.eq.s32.totalorder %s25, 0
        // Predicated region
        $region37: #{tpu_custom_call.1} parent=31 // pred_check
          %p255 = pneg %p254
        $region38: #{tpu_custom_call.1} parent=31 // pred_check_branch
          %257 = sbr.rel (%p255) target = $region40
        $region39: #{tpu_custom_call.1} parent=31 // pred_region
          %258 = vst [vmem:[#allocation2] sm:$0xff] 0.0
        $region40: #{tpu_custom_call.1} parent=31 // pred_fallthru
          _
        %v259 = vld [vmem:[#allocation2] sm:$0xff]
        %v260 = vld [vmem:[%s205] sm:$0xff]
        %v261 = vld [vmem:[%s252] sm:$0x1]
        %v263 = vlaneseq
        %v264 = vshrl.u32 %v263, 7
        %v265 = vsub.s32 0, %v264
        %v266 = vrot.slane %v261, %v265
        %v268 = vmul.f32 %v260, %v266
        %v269 = vadd.f32 %v259, %v268
        %v270 = vld [vmem:[%s205 + $0x8] sm:$0xff]
        %v271 = vld [vmem:[%s252 + $0x1] sm:$0x1]
        %v273 = vlaneseq
        %v274 = vshrl.u32 %v273, 7
        %v275 = vsub.s32 0, %v274
        %v276 = vrot.slane %v271, %v275
        %v278 = vmul.f32 %v270, %v276
        %v279 = vadd.f32 %v269, %v278
        %280 = vst [vmem:[#allocation2] sm:$0xff] %v279
        // Predicated region
        $region41: #{tpu_custom_call.1} parent=31 // pred_check
          %p281 = pneg %p254
        $region42: #{tpu_custom_call.1} parent=31 // pred_check_branch
          %283 = sbr.rel (%p281) target = $region44
        $region43: #{tpu_custom_call.1} parent=31 // pred_region
          %v284 = vld [vmem:[#allocation2] sm:$0xff]
          %285 = vadd.xlane.f32.xlu0 %v284
          %v286 = vpop.xlane.xlu0 %285
          %v287 = vld [vmem:[%s244] sm:$0xff]
          %v288 = vsub.f32 %v287, %v286
          %v289 = vand.u32 2147483647, %v288
          %vm290 = vcmask 7168
          %v291 = vsel %vm290, %v289, 0.0
          %292 = vadd.xlane.f32.xlu0 %v291
          %v293 = vpop.xlane.xlu0 %292
          %v294 = vrot.slane %v293, 4
          %v295 = vadd.f32 %v293, %v294
          %v296 = vrot.slane %v295, 2
          %v297 = vadd.f32 %v295, %v296
          %v298 = vrot.slane %v297, 1
          %v299 = vadd.f32 %v297, %v298
          %s300 = vtos %v299
          %v301 = vstv %s300
          %302 = vst [vmem:[%s239] sm:$0xff] %v301
        $region44: #{tpu_custom_call.1} parent=31 // pred_fallthru
          _
        %s303 = sand.u32 %s122, 1
        %s304 = scalar_lea.sflag [#allocation5], %s303
        %s305 = sand.u32 %s122, 1
        %s306 = smul.addr %s305, 8
        %s307 = scalar_lea.vmem [#allocation6], %s306
        // Predicated region
        $region45: #{tpu_custom_call.1} parent=31 // pred_check
          %p308 = pneg %p132
        $region46: #{tpu_custom_call.1} parent=31 // pred_check_branch
          %310 = sbr.rel (%p308) target = $region48
        $region47: #{tpu_custom_call.1} parent=31 // pred_region
          %s312 = ssub.s32 128, 128
          %313 = vsyncadd %s304, %s312
          %s314 = smul.addr %s24, 128
          %s315 = scalar_lea.hbm %s3, %s314
          %s317 = sshll.u32 %s307, 4
          %s318 = int_to_ptr.vmem [resolvable:$true] %s317
          %320 = dma.vmem_to_hbm [thread:$0]  %s318, 128, %s315, %s304
        $region48: #{tpu_custom_call.1} parent=31 // pred_fallthru
          _
      $region32: #{tpu_custom_call.1} parent=5 // pred_fallthru
        _
      %p321 = scmp.le.s32.totalorder 2, %s15
      // Predicated region
      $region49: #{tpu_custom_call.1} parent=5 // pred_check
        %p322 = pneg %p321
      $region50: #{tpu_custom_call.1} parent=5 // pred_check_branch
        %324 = sbr.rel (%p322) target = $region52
      $region51: #{tpu_custom_call.1} parent=5 // pred_region
        %s325 = ssub.s32 %s15, 2
        // Predicated region
        $region53: #{tpu_custom_call.1} parent=51 // pred_check
          %p326 = pneg %p138
        $region54: #{tpu_custom_call.1} parent=51 // pred_check_branch
          %328 = sbr.rel (%p326) target = $region56
        $region55: #{tpu_custom_call.1} parent=51 // pred_region
          %s329 = sand.u32 %s123, 1
          %s330 = scalar_lea.sflag [#allocation5], %s329
          %s331 = sand.u32 %s123, 1
          %s332 = smul.addr %s331, 8
          %s333 = scalar_lea.vmem [#allocation6], %s332
          %334 = dma.done %s330, 128
        $region56: #{tpu_custom_call.1} parent=51 // pred_fallthru
          _
      $region52: #{tpu_custom_call.1} parent=5 // pred_fallthru
        _
    $region6: #{tpu_custom_call.1} parent=1 // loop_footer
      %s19 = sadd.s32 1, %s15
    $region7: #{tpu_custom_call.1} parent=1 // loop_footer_branch
      %14 = sbr.rel target = $region3
    $region8: #{tpu_custom_call.1} parent=1 // loop_exit
      _
    %335 = vsyncpa [#allocation4], 1
    %s336 = scalar_lea.sflag [#allocation4], 1
    %337 = vsyncpa %s336, 1
    %338 = vsyncpa [#allocation5], 1
    %s339 = scalar_lea.sflag [#allocation5], 1
    %340 = vsyncpa %s339, 1

</llo_original>
